<compile_context>
chip_gen: v7x
topology: tpu7x:2x2x1
jax: 0.10.0
libtpu: 0.0.40
codegen_flags: <defaults>
</compile_context>

<pallas_src>
import functools

import jax
import jax.numpy as jnp
from jax.experimental import pallas as pl
from jax.experimental.pallas import tpu as pltpu


_LANE = 128                     # lane width granularity
_MAX_COLS = 4096                # widest lane-dense slab we try for
_TARGET_BLOCK_BYTES = 1 << 20   # ~1 MiB per buffer: safe on v5e/v6e/v7x VMEM


def _sublane(dtype) -> int:
    """Second-to-last tile-dim granularity: 8 (4B), 16 (2B), 32 (1B)."""
    itemsize = jnp.dtype(dtype).itemsize
    return max(8, 32 // max(1, itemsize))


def _lambda_kernel(x_ref, o_ref, *, func, compute_dtype):
    x = x_ref[...]
    if compute_dtype is not None:
        # f32 compute for sub-32-bit floats (v5e VPU/EUP have no bf16 path).
        x = x.astype(compute_dtype)
    o_ref[...] = func(x).astype(o_ref.dtype)


class Lambda:
    """Pallas-backed Lambda: applies `func` to the input tensor on-TPU."""

    def __init__(self, func):
        self.func = func

    def __call__(self, x):
        orig_shape = x.shape
        in_dtype = x.dtype

        # Infer output shape/dtype of the wrapped callable.
        out_abs = jax.eval_shape(
            self.func, jax.ShapeDtypeStruct(orig_shape, in_dtype))
        if out_abs.shape != tuple(orig_shape):
            # TODO(synk): non-shape-preserving funcs (reshape/view-style
            # lambdas) have no clean elementwise-tiled Pallas mapping; they
            # stay as plain JAX glue outside the kernel.
            return self.func(x)
        out_dtype = out_abs.dtype

        n = x.size
        if n == 0:
            return self.func(x)

        sublane = _sublane(in_dtype)
        itemsize = jnp.dtype(in_dtype).itemsize
        out_itemsize = jnp.dtype(out_dtype).itemsize

        # ---- layout: widest lane-dense slab that needs no padding ----------
        cols = 0
        c = _MAX_COLS
        while c >= _LANE:
            if n % c == 0:
                cols = c
                break
            c -= _LANE

        flat = x.reshape(-1)
        padded = False
        if cols == 0:
            # Ragged element count (rare): 128-lane slab with a padded tail.
            # TODO(synk): pad region runs through `func` (fine for finite
            # elementwise funcs); padded values are discarded on output.
            cols = _LANE
            rows = -(-n // cols)
            rows = -(-rows // sublane) * sublane
            total = rows * cols
            flat = jnp.pad(flat, (0, total - n))
            padded = True
        else:
            rows = n // cols
        slab = flat.reshape(rows, cols)

        # ---- tiling: ~1 MiB per buffer, sublane-aligned row tile ------------
        budget_itemsize = max(itemsize, out_itemsize, 4)
        tile_r = (_TARGET_BLOCK_BYTES // (cols * budget_itemsize))
        tile_r = max(sublane, (tile_r // sublane) * sublane)
        if tile_r >= rows:
            tile_r = rows            # single full-extent block (always legal)
        grid = (-(-rows // tile_r),)  # trailing partial block handled by Pallas

        compute_dtype = None
        if jnp.issubdtype(in_dtype, jnp.floating) and itemsize < 4:
            compute_dtype = jnp.float32

        kernel = functools.partial(
            _lambda_kernel, func=self.func, compute_dtype=compute_dtype)

        out_slab = pl.pallas_call(
            kernel,
            out_shape=jax.ShapeDtypeStruct((rows, cols), out_dtype),
            grid=grid,
            in_specs=[pl.BlockSpec((tile_r, cols), lambda i: (i, 0))],
            out_specs=pl.BlockSpec((tile_r, cols), lambda i: (i, 0)),
            compiler_params=pltpu.CompilerParams(
                # Parallel axis: v7x shards row tiles across both TensorCores;
                # neutral on single-TC v5e/v6e.
                dimension_semantics=("parallel",),
            ),
            cost_estimate=pl.CostEstimate(
                flops=2 * n,
                transcendentals=n,
                bytes_accessed=n * (itemsize + out_itemsize),
            ),
        )(slab)

        if padded:
            out = out_slab.reshape(-1)[:n].reshape(orig_shape)
        else:
            out = out_slab.reshape(orig_shape)
        return out


if __name__ == "__main__":
    # Representative func used with Lambda in VAE-style code: x * sigmoid(x).
    func = lambda x: x * jax.nn.sigmoid(x)
    module = Lambda(func)

    key = jax.random.PRNGKey(0)

    # Main case (NCHW, element count divisible by 128 -> no padding copy).
    x = jax.random.normal(key, (2, 4, 16, 16), dtype=jnp.float32)
    y = module(x)
    jax.block_until_ready(y)
    y_ref = func(x)
    assert y.shape == x.shape and y.dtype == y_ref.dtype
    assert jnp.allclose(y, y_ref, atol=1e-6, rtol=1e-6)

    # Multi-tile path (several grid steps, pipelined).
    x_big = jax.random.normal(key, (8, 64, 32, 32), dtype=jnp.float32)
    y_big = module(x_big)
    jax.block_until_ready(y_big)
    assert jnp.allclose(y_big, func(x_big), atol=1e-6, rtol=1e-6)

    # Ragged element count exercises the padded-tail fallback path.
    x_rag = jax.random.normal(key, (2, 3, 5, 7), dtype=jnp.float32)
    y_rag = module(x_rag)
    jax.block_until_ready(y_rag)
    assert jnp.allclose(y_rag, func(x_rag), atol=1e-6, rtol=1e-6)

    print("KERNEL_OK")
</pallas_src>

<mosaic_0001>
module attributes {stable_mosaic.version = 11 : i64} {
  func.func @_lambda_kernel(%arg0: i32, %arg1: memref<1x2048xf32, #tpu.memory_space<vmem>>, %arg2: memref<1x2048xf32, #tpu.memory_space<vmem>>) attributes {dimension_semantics = [#tpu.dimension_semantics<parallel>], iteration_bounds = array<i64: 1>, scalar_prefetch = 0 : i64, scratch_operands = 0 : i64, tpu.core_type = #tpu.core_type<tc>, window_params = [{transform_indices = @transform_0, window_bounds = array<i64: 1, 2048>}, {transform_indices = @transform_1, window_bounds = array<i64: 1, 2048>}]} {
    %c0 = arith.constant 0 : index
    %c0_0 = arith.constant 0 : index
    %0 = vector.load %arg1[%c0, %c0_0] : memref<1x2048xf32, #tpu.memory_space<vmem>>, vector<1x2048xf32>
    %1 = arith.negf %0 : vector<1x2048xf32>
    %2 = math.exp %1 : vector<1x2048xf32>
    %cst = arith.constant 1.000000e+00 : f32
    %3 = vector.broadcast %cst : f32 to vector<1x2048xf32>
    %4 = arith.addf %3, %2 : vector<1x2048xf32>
    %5 = arith.divf %3, %4 : vector<1x2048xf32>
    %6 = arith.mulf %0, %5 : vector<1x2048xf32>
    %c0_1 = arith.constant 0 : index
    %c0_2 = arith.constant 0 : index
    %7 = vector.load %arg2[%c0_1, %c0_2] : memref<1x2048xf32, #tpu.memory_space<vmem>>, vector<1x2048xf32>
    tpu.vector_store %arg2[%c0_1, %c0_2], %6 {strides = array<i32>} : memref<1x2048xf32, #tpu.memory_space<vmem>>, vector<1x2048xf32>,
    return
  }
  func.func @transform_0(%arg0: i32) -> (i32, i32) {
    %c0_i32 = arith.constant 0 : i32
    %c0_i32_0 = arith.constant 0 : i32
    return %arg0, %c0_i32 : i32, i32
  }
  func.func @transform_1(%arg0: i32) -> (i32, i32) {
    %c0_i32 = arith.constant 0 : i32
    %c0_i32_0 = arith.constant 0 : i32
    return %arg0, %c0_i32 : i32, i32
  }
}

</mosaic_0001>

<llo_original>
// kernel: tpu_custom_call.1
$region0: #{tpu_custom_call.1}
  #allocation0 [shape = 'u32[]', space=smem, size = 0x4, offset = 0x4, fixed_abs, tag = 'smem constant byte address 0x4 - core index']
  #allocation1 [shape = 'u32[144,128]{1,0:T(1,128)}', space=vmem, size = 0x12000, scoped, tag = 'internal scratch']
  %s0 = inlined_call_operand.hbm [shape: f32[1,2048], index: 0, kind: input, shape index: {}]
  %s1 = inlined_call_operand.hbm [shape: f32[1,2048], index: 1, kind: output, shape index: {}]
  %s2 = sld [smem:[#allocation0]]
  $region18: #{tpu_custom_call.1} parent=0
    _
  %s4 = ssub.s32 1, %s2
  %s5 = scalar_select 0, %s4, %s2
  $region1: #{tpu_custom_call.1} parent=0
    #allocation2 [shape = 'u8[8192]{0}', space=vmem, size = 0x2000, scoped, tag = 'input window, operand 0, single buffered']
    #allocation3 [shape = 's32[1]{0}', space=sflag, size = 0x4, scoped, tag = 'scoped memory for tpu_custom_call.1']
    #allocation4 [shape = 's32[1]{0}', space=sflag, size = 0x4, scoped, tag = 'scoped memory for tpu_custom_call.1']
    #allocation5 [shape = 'u8[8192]{0}', space=vmem, size = 0x2000, scoped, tag = 'output window, operand 0, single buffered']
    %6 = vsyncpa [#allocation3], 0
    %7 = vsyncpa [#allocation4], 0
    // Predicated region
    $region2: #{tpu_custom_call.1} parent=1 // pred_check
      _
    $region3: #{tpu_custom_call.1} parent=1 // pred_check_branch
      %9 = sbr.rel (0) target = $region5
    $region4: #{tpu_custom_call.1} parent=1 // pred_region
      %s11 = ssub.s32 256, 256
      %12 = vsyncadd [#allocation3], %s11
      %s14 = sshll.u32 [#allocation2], 4
      %s15 = int_to_ptr.vmem [resolvable:$true] %s14
      %17 = dma.hbm_to_vmem [thread:$0]  %s0, 256, %s15, [#allocation3]
    $region5: #{tpu_custom_call.1} parent=1 // pred_fallthru
      _
    // Predicated region
    $region6: #{tpu_custom_call.1} parent=1 // pred_check
      _
    $region7: #{tpu_custom_call.1} parent=1 // pred_check_branch
      %19 = sbr.rel (0) target = $region9
    $region8: #{tpu_custom_call.1} parent=1 // pred_region
      %20 = dma.done [#allocation3], 256
    $region9: #{tpu_custom_call.1} parent=1 // pred_fallthru
      _
    %v21 = vld [vmem:[#allocation2] sm:$0xff]
    %v22 = vld [vmem:[#allocation2 + $0x8] sm:$0xff]
    %v23 = vxor.u32 %v21, 2147483648
    %v24 = vxor.u32 %v22, 2147483648
    %v25 = vmul.f32 %v23, 1.442695
    %v26 = vpow.pop %v25
    %v27 = vmul.f32 %v24, 1.442695
    %v28 = vpow.pop %v27
    %v29 = vadd.f32 %v26, 1.0
    %v30 = vadd.f32 %v28, 1.0
    %v31 = vrcp.pop %v29
    %v32 = vmul.f32 1.0, %v31
    %v33 = vrcp.pop %v30
    %v34 = vmul.f32 1.0, %v33
    %v35 = vmul.f32 %v21, %v32
    %v36 = vmul.f32 %v22, %v34
    %37 = vst [vmem:[#allocation5] sm:$0xff] %v35
    %38 = vst [vmem:[#allocation5 + $0x8] sm:$0xff] %v36
    // Predicated region
    $region10: #{tpu_custom_call.1} parent=1 // pred_check
      _
    $region11: #{tpu_custom_call.1} parent=1 // pred_check_branch
      %40 = sbr.rel (0) target = $region13
    $region12: #{tpu_custom_call.1} parent=1 // pred_region
      %s42 = ssub.s32 256, 256
      %43 = vsyncadd [#allocation4], %s42
      %s45 = sshll.u32 [#allocation5], 4
      %s46 = int_to_ptr.vmem [resolvable:$true] %s45
      %48 = dma.vmem_to_hbm [thread:$0]  %s46, 256, %s1, [#allocation4]
    $region13: #{tpu_custom_call.1} parent=1 // pred_fallthru
      _
    // Predicated region
    $region14: #{tpu_custom_call.1} parent=1 // pred_check
      _
    $region15: #{tpu_custom_call.1} parent=1 // pred_check_branch
      %50 = sbr.rel (0) target = $region17
    $region16: #{tpu_custom_call.1} parent=1 // pred_region
      %51 = dma.done [#allocation4], 256
    $region17: #{tpu_custom_call.1} parent=1 // pred_fallthru
      _
    %52 = vsyncpa [#allocation3], 1
    %53 = vsyncpa [#allocation4], 1

</llo_original>
